<compile_context>
chip_gen: v6e
topology: v6e:2x2x1
jax: 0.10.0
libtpu: 0.0.40
codegen_flags: <defaults>
</compile_context>

<pallas_src>
from functools import partial

import jax
import jax.numpy as jnp
from jax.experimental import pallas as pl
from jax.experimental.pallas import tpu as pltpu


_LANE = 128
_DEFAULT_LANE_TILE_CAP = 256 * 1024  # ~3 MiB f32 input block at C=3


def _prompt_weights(prompt: str, num_channels: int) -> jax.Array:
    """Deterministic 'text embedding' surrogate: (C + 1, 1) channel weights + bias row."""
    seed = sum(ord(ch) for ch in prompt) % (2 ** 31)
    return jax.random.normal(
        jax.random.PRNGKey(seed), (num_channels + 1, 1), dtype=jnp.float32
    )


def _choose_lane_tile(hw: int, cap: int) -> int:
    """Pick a lane tile: multiple of 128 dividing hw (<= cap), else the full extent."""
    cap = max(_LANE, (cap // _LANE) * _LANE)
    if hw <= cap or hw % _LANE != 0:
        return hw  # full-extent last dim is always a legal block dim
    t = cap
    while hw % t != 0:  # terminates at t == 128 since hw % 128 == 0
        t -= _LANE
    return t


def _segment_kernel(w_ref, img_ref, mask_ref):
    """One (image, spatial-tile) block per grid step.

    w_ref:    VMEM (C + 1, 1) f32 — rows 0..C-1: channel weights, row C: bias.
    img_ref:  VMEM (1, C, T)   f32 — lane-dense NCHW-flattened image tile.
    mask_ref: VMEM (1, 1, T)   f32 — output mask tile ({0, 1} float32).
    """
    c = img_ref.shape[1]
    # Channel-unrolled weighted sum: one (1, T) row live at a time (low VMEM
    # pressure, pure VPU, no cross-sublane reduce).
    acc = None
    for ch in range(c):
        xc = jnp.clip(img_ref[0, ch:ch + 1, :], 0.0, 1.0)   # image.clamp(0.0, 1.0)
        term = xc * w_ref[ch:ch + 1, :]                      # (1, T) * (1, 1)
        acc = term if acc is None else acc + term
    score = acc + w_ref[c:c + 1, :]                          # + bias, (1, T)
    # SAM returns a boolean mask cast to float32; surrogate: threshold at 0.
    mask_ref[0] = (score > 0.0).astype(jnp.float32)


@partial(jax.jit, static_argnames=("prompt", "lane_tile_cap"))
def lang_sam_text_segmentor(
    images, prompt: str, lane_tile_cap: int = _DEFAULT_LANE_TILE_CAP
):
    """images: (B, H, W, C) float32 (NHWC, as passed to the torch module).

    Returns (B, 1, H, W) float32 masks, matching torch.stack(masks, dim=0).
    """
    B, H, W, C = images.shape
    HW = H * W

    w = _prompt_weights(prompt, C)

    # rearrange 'b h w c -> b c h w' (module semantics), then flatten spatial
    # dims so the last (lane) dim is H*W.  allow_input_fusion below lets XLA
    # fuse this relayout into the pallas_call operand instead of a separate
    # HBM round-trip.
    images_flat = (
        jnp.transpose(images, (0, 3, 1, 2)).astype(jnp.float32).reshape(B, C, HW)
    )

    t_l = _choose_lane_tile(HW, lane_tile_cap)
    grid = (B, HW // t_l)

    grid_spec = pltpu.PrefetchScalarGridSpec(
        num_scalar_prefetch=0,
        grid=grid,
        in_specs=[
            # tiny weight column, whole array in VMEM every step (16 B)
            pl.BlockSpec((C + 1, 1), lambda b, t: (0, 0)),
            # lane-dense image tile: (1, C, T_L), T_L multiple of 128 (or full HW)
            pl.BlockSpec((1, C, t_l), lambda b, t: (b, 0, t)),
        ],
        out_specs=pl.BlockSpec((1, 1, t_l), lambda b, t: (b, 0, t)),
    )

    masks_flat = pl.pallas_call(
        _segment_kernel,
        out_shape=jax.ShapeDtypeStruct((B, 1, HW), jnp.float32),
        grid_spec=grid_spec,
        compiler_params=pltpu.CompilerParams(
            dimension_semantics=("parallel", "parallel"),
            allow_input_fusion=[False, True],
        ),
    )(w, images_flat)

    return masks_flat.reshape(B, 1, H, W)


def _reference_masks(images, prompt: str):
    """Pure-JAX reference of the surrogate forward pass."""
    B, H, W, C = images.shape
    w = _prompt_weights(prompt, C)
    x = jnp.clip(jnp.transpose(images, (0, 3, 1, 2)), 0.0, 1.0)          # (B, C, H, W)
    score = jnp.tensordot(w[:C, 0], x, axes=([0], [1])) + w[C, 0]        # (B, H, W)
    return (score > 0.0).astype(jnp.float32)[:, None]                    # (B, 1, H, W)


if __name__ == "__main__":
    key = jax.random.PRNGKey(0)
    prompt = "a photo of a cat"

    # Case 1: small RGB batch; values outside [0, 1] exercise the in-kernel clamp.
    B, H, W, C = 2, 16, 16, 3
    k1, k2 = jax.random.split(key)
    images = jax.random.uniform(
        k1, (B, H, W, C), jnp.float32, minval=-0.25, maxval=1.25
    )
    masks = jax.block_until_ready(lang_sam_text_segmentor(images, prompt))
    assert masks.shape == (B, 1, H, W), masks.shape
    assert masks.dtype == jnp.float32, masks.dtype
    assert bool(jnp.all((masks == 0.0) | (masks == 1.0)))
    ref = _reference_masks(images, prompt)
    assert float(jnp.mean(jnp.abs(masks - ref))) < 1e-3

    # Case 2: force the 2-D (batch, spatial-tile) grid path with a small lane-tile cap.
    B2, H2, W2 = 2, 32, 32
    images2 = jax.random.uniform(
        k2, (B2, H2, W2, C), jnp.float32, minval=-0.25, maxval=1.25
    )
    masks2 = jax.block_until_ready(
        lang_sam_text_segmentor(images2, prompt, lane_tile_cap=256)
    )
    assert masks2.shape == (B2, 1, H2, W2), masks2.shape
    assert masks2.dtype == jnp.float32, masks2.dtype
    assert bool(jnp.all((masks2 == 0.0) | (masks2 == 1.0)))
    ref2 = _reference_masks(images2, prompt)
    assert float(jnp.mean(jnp.abs(masks2 - ref2))) < 1e-3

    print("KERNEL_OK")
</pallas_src>

<mosaic_0001>
module attributes {stable_mosaic.version = 11 : i64} {
  func.func @_segment_kernel(%arg0: i32, %arg1: i32, %arg2: memref<4x1xf32, #tpu.memory_space<vmem>>, %arg3: memref<1x3x256xf32, #tpu.memory_space<vmem>>, %arg4: memref<1x1x256xf32, #tpu.memory_space<vmem>>) attributes {dimension_semantics = [#tpu.dimension_semantics<parallel>, #tpu.dimension_semantics<parallel>], iteration_bounds = array<i64: 2, 1>, scalar_prefetch = 0 : i64, scratch_operands = 0 : i64, tpu.core_type = #tpu.core_type<tc>, window_params = [{pipeline_mode = #tpu.pipeline_mode<synchronous>, transform_indices = @transform_0, window_bounds = array<i64: 4, 1>}, {transform_indices = @transform_1, window_bounds = array<i64: 1, 3, 256>}, {transform_indices = @transform_2, window_bounds = array<i64: 1, 1, 256>}]} {
    %c0 = arith.constant 0 : index
    %c0_0 = arith.constant 0 : index
    %c0_1 = arith.constant 0 : index
    %0 = vector.load %arg3[%c0, %c0_0, %c0_1] : memref<1x3x256xf32, #tpu.memory_space<vmem>>, vector<1x1x256xf32>
    %1 = vector.shape_cast %0 : vector<1x1x256xf32> to vector<1x256xf32>
    %cst = arith.constant 0.000000e+00 : f32
    %cst_2 = arith.constant 1.000000e+00 : f32
    %2 = vector.broadcast %cst : f32 to vector<1x256xf32>
    %3 = arith.maximumf %2, %1 : vector<1x256xf32>
    %4 = vector.broadcast %cst_2 : f32 to vector<1x256xf32>
    %5 = arith.minimumf %4, %3 : vector<1x256xf32>
    %c0_3 = arith.constant 0 : index
    %c0_4 = arith.constant 0 : index
    %6 = vector.load %arg2[%c0_3, %c0_4] : memref<4x1xf32, #tpu.memory_space<vmem>>, vector<1x1xf32>
    %7 = vector.broadcast %6 : vector<1x1xf32> to vector<1x256xf32>
    %8 = arith.mulf %5, %7 : vector<1x256xf32>
    %c0_5 = arith.constant 0 : index
    %c1 = arith.constant 1 : index
    %c0_6 = arith.constant 0 : index
    %9 = vector.load %arg3[%c0_5, %c1, %c0_6] : memref<1x3x256xf32, #tpu.memory_space<vmem>>, vector<1x1x256xf32>
    %10 = vector.shape_cast %9 : vector<1x1x256xf32> to vector<1x256xf32>
    %cst_7 = arith.constant 0.000000e+00 : f32
    %cst_8 = arith.constant 1.000000e+00 : f32
    %11 = vector.broadcast %cst_7 : f32 to vector<1x256xf32>
    %12 = arith.maximumf %11, %10 : vector<1x256xf32>
    %13 = vector.broadcast %cst_8 : f32 to vector<1x256xf32>
    %14 = arith.minimumf %13, %12 : vector<1x256xf32>
    %c1_9 = arith.constant 1 : index
    %c0_10 = arith.constant 0 : index
    %15 = vector.load %arg2[%c1_9, %c0_10] : memref<4x1xf32, #tpu.memory_space<vmem>>, vector<1x1xf32>
    %16 = vector.broadcast %15 : vector<1x1xf32> to vector<1x256xf32>
    %17 = arith.mulf %14, %16 : vector<1x256xf32>
    %18 = arith.addf %8, %17 : vector<1x256xf32>
    %c0_11 = arith.constant 0 : index
    %c2 = arith.constant 2 : index
    %c0_12 = arith.constant 0 : index
    %19 = vector.load %arg3[%c0_11, %c2, %c0_12] : memref<1x3x256xf32, #tpu.memory_space<vmem>>, vector<1x1x256xf32>
    %20 = vector.shape_cast %19 : vector<1x1x256xf32> to vector<1x256xf32>
    %cst_13 = arith.constant 0.000000e+00 : f32
    %cst_14 = arith.constant 1.000000e+00 : f32
    %21 = vector.broadcast %cst_13 : f32 to vector<1x256xf32>
    %22 = arith.maximumf %21, %20 : vector<1x256xf32>
    %23 = vector.broadcast %cst_14 : f32 to vector<1x256xf32>
    %24 = arith.minimumf %23, %22 : vector<1x256xf32>
    %c2_15 = arith.constant 2 : index
    %c0_16 = arith.constant 0 : index
    %25 = vector.load %arg2[%c2_15, %c0_16] : memref<4x1xf32, #tpu.memory_space<vmem>>, vector<1x1xf32>
    %26 = vector.broadcast %25 : vector<1x1xf32> to vector<1x256xf32>
    %27 = arith.mulf %24, %26 : vector<1x256xf32>
    %28 = arith.addf %18, %27 : vector<1x256xf32>
    %c3 = arith.constant 3 : index
    %c0_17 = arith.constant 0 : index
    %29 = vector.load %arg2[%c3, %c0_17] : memref<4x1xf32, #tpu.memory_space<vmem>>, vector<1x1xf32>
    %30 = vector.broadcast %29 : vector<1x1xf32> to vector<1x256xf32>
    %31 = arith.addf %28, %30 : vector<1x256xf32>
    %cst_18 = arith.constant 0.000000e+00 : f32
    %32 = vector.broadcast %cst_18 : f32 to vector<1x256xf32>
    %33 = arith.cmpf ogt, %31, %32 : vector<1x256xf32>
    %34 = arith.extui %33 : vector<1x256xi1> to vector<1x256xi32>
    %35 = arith.sitofp %34 : vector<1x256xi32> to vector<1x256xf32>
    %c0_19 = arith.constant 0 : index
    %c0_20 = arith.constant 0 : index
    %c0_21 = arith.constant 0 : index
    %36 = vector.load %arg4[%c0_19, %c0_20, %c0_21] : memref<1x1x256xf32, #tpu.memory_space<vmem>>, vector<1x1x256xf32>
    %37 = vector.shape_cast %36 : vector<1x1x256xf32> to vector<1x256xf32>
    %38 = vector.shape_cast %35 : vector<1x256xf32> to vector<1x1x256xf32>
    tpu.vector_store %arg4[%c0_19, %c0_20, %c0_21], %38 {strides = array<i32>} : memref<1x1x256xf32, #tpu.memory_space<vmem>>, vector<1x1x256xf32>,
    return
  }
  func.func @transform_0(%arg0: i32, %arg1: i32) -> (i32, i32) {
    %c0_i32 = arith.constant 0 : i32
    %c0_i32_0 = arith.constant 0 : i32
    %c0_i32_1 = arith.constant 0 : i32
    return %c0_i32, %c0_i32_0 : i32, i32
  }
  func.func @transform_1(%arg0: i32, %arg1: i32) -> (i32, i32, i32) {
    %c0_i32 = arith.constant 0 : i32
    %c0_i32_0 = arith.constant 0 : i32
    return %arg0, %c0_i32, %arg1 : i32, i32, i32
  }
  func.func @transform_2(%arg0: i32, %arg1: i32) -> (i32, i32, i32) {
    %c0_i32 = arith.constant 0 : i32
    %c0_i32_0 = arith.constant 0 : i32
    return %arg0, %c0_i32, %arg1 : i32, i32, i32
  }
}

</mosaic_0001>

<llo_original>
// kernel: lang_sam_text_segmentor.1
$region0: #{lang_sam_text_segmentor.1}
  #allocation0 [shape = 'u32[]', space=smem, size = 0x4, offset = 0x4, fixed_abs, tag = 'smem constant byte address 0x4 - core index']
  #allocation1 [shape = 'u32[144,128]{1,0:T(1,128)}', space=vmem, size = 0x12000, scoped, tag = 'internal scratch']
  %s0 = inlined_call_operand.vmem [shape: f32[4,1], index: 0, kind: input, shape index: {}]
  %s1 = inlined_call_operand.vmem [shape: f32[2,3,256], index: 1, kind: input, shape index: {}]
  %s2 = inlined_call_operand.vmem [shape: f32[2,1,256], index: 2, kind: output, shape index: {}]
  %s3 = sld [smem:[#allocation0]]
  $region41: #{lang_sam_text_segmentor.1} parent=0
    _
  %s5 = ssub.s32 1, %s3
  %s6 = scalar_select 0, %s5, %s3
  loop: start=0, step=1, limit=4
  $region2: #{lang_sam_text_segmentor.1} parent=0 // loop_pre_header
    _
  $region3: #{lang_sam_text_segmentor.1} parent=0 // loop_header
    %s8 = sphi 0, %s12
    %p9 = scmp.ge.s32.totalorder %s8, 4
    %s15 = sphi 0, %s27
    %s16 = sphi 0, %s23
    %s17 = sphi 0, %s15
    %s18 = sphi 0, %s16
    %s19 = sphi 0, %s17
    %s20 = sphi 0, %s18
    %s28 = sphi 0, %s28
    %s30 = sphi 0, %s28
    %s31 = sphi 0, %s30
    %s45 = sphi 0, %s31
    %s53 = sphi 0, %s55
    %s56 = sphi 0, %s53
    %s57 = sphi 0, %s56
    %s73 = sphi 0, %s57
    %s81 = sphi 0, %s83
    %s84 = sphi 0, %s81
    %s85 = sphi 0, %s84
    %s101 = sphi 0, %s85
  $region4: #{lang_sam_text_segmentor.1} parent=0 // loop_header_branch
    %11 = sbr.rel (%p9) target = $region8
  $region5: #{lang_sam_text_segmentor.1} parent=0 // loop_body
    %s13 = ssub.s32 %s8, 1
    %s14 = ssub.s32 %s8, 2
    %s21 = sadd.s32 1, %s16
    %p22 = scmp.ge.s32.totalorder %s21, 1
    %s23 = scalar_select %p22, 0, %s21
    %s24 = sadd.s32 1, %s15
    %s25 = scalar_select %p22, %s24, %s15
    %p26 = scmp.ge.s32.totalorder %s25, 2
    %s27 = scalar_select %p26, 0, %s25
    %s29 = sadd.s32 %s28, 1
    %p32 = scmp.eq.s32.totalorder %s8, 1
    %p33 = scmp.ne.s32.totalorder %s28, %s30
    %p34 = scmp.eq.s32.totalorder %s8, 0
    %p35 = por %p33, %p34
    %p36 = scmp.ne.s32.totalorder %s28, %s30
    %p37 = scmp.eq.s32.totalorder %s13, 1
    %p38 = por %p36, %p37
    %p39 = scmp.ne.s32.totalorder %s30, %s31
    %p40 = scmp.eq.s32.totalorder %s13, 0
    %p41 = por %p39, %p40
    %p42 = scmp.ne.s32.totalorder %s30, %s31
    %p43 = scmp.eq.s32.totalorder %s14, 1
    %p44 = por %p42, %p43
    %p46 = scmp.ne.s32.totalorder %s31, %s45
    %p47 = scmp.eq.s32.totalorder %s14, 0
    %p48 = por %p46, %p47
    %s49 = ssub.s32 %s15, %s27
    %s50 = ssub.s32 %s16, %s23
    %s51 = sor.u32 %s49, %s50
    %p52 = scmp.eq.s32.totalorder %s51, 0
    %s54 = sadd.s32 %s53, 1
    %s55 = scalar_select %p52, %s53, %s54
    %p58 = pneg %p52
    %p59 = scmp.eq.s32.totalorder %s8, 1
    %p60 = por %p58, %p59
    %p61 = scmp.ne.s32.totalorder %s53, %s56
    %p62 = scmp.eq.s32.totalorder %s8, 0
    %p63 = por %p61, %p62
    %p64 = scmp.ne.s32.totalorder %s53, %s56
    %p65 = scmp.eq.s32.totalorder %s13, 1
    %p66 = por %p64, %p65
    %p67 = scmp.ne.s32.totalorder %s56, %s57
    %p68 = scmp.eq.s32.totalorder %s13, 0
    %p69 = por %p67, %p68
    %p70 = scmp.ne.s32.totalorder %s56, %s57
    %p71 = scmp.eq.s32.totalorder %s14, 1
    %p72 = por %p70, %p71
    %p74 = scmp.ne.s32.totalorder %s57, %s73
    %p75 = scmp.eq.s32.totalorder %s14, 0
    %p76 = por %p74, %p75
    %s77 = ssub.s32 %s15, %s27
    %s78 = ssub.s32 %s16, %s23
    %s79 = sor.u32 %s77, %s78
    %p80 = scmp.eq.s32.totalorder %s79, 0
    %s82 = sadd.s32 %s81, 1
    %s83 = scalar_select %p80, %s81, %s82
    %p86 = pneg %p80
    %p87 = scmp.eq.s32.totalorder %s8, 1
    %p88 = por %p86, %p87
    %p89 = scmp.ne.s32.totalorder %s81, %s84
    %p90 = scmp.eq.s32.totalorder %s8, 0
    %p91 = por %p89, %p90
    %p92 = scmp.ne.s32.totalorder %s81, %s84
    %p93 = scmp.eq.s32.totalorder %s13, 1
    %p94 = por %p92, %p93
    %p95 = scmp.ne.s32.totalorder %s84, %s85
    %p96 = scmp.eq.s32.totalorder %s13, 0
    %p97 = por %p95, %p96
    %p98 = scmp.ne.s32.totalorder %s84, %s85
    %p99 = scmp.eq.s32.totalorder %s14, 1
    %p100 = por %p98, %p99
    %p102 = scmp.ne.s32.totalorder %s85, %s101
    %p103 = scmp.eq.s32.totalorder %s14, 0
    %p104 = por %p102, %p103
    %p105 = scmp.le.s32.totalorder 1, %s8
    %p106 = scmp.lt.s32.totalorder %s8, 3
    %p107 = pnand %p105, %p106
    %p108 = pneg %p107
    // Predicated region
    $region9: #{lang_sam_text_segmentor.1} parent=5 // pred_check
      _
    $region10: #{lang_sam_text_segmentor.1} parent=5 // pred_check_branch
      %110 = sbr.rel (%p107) target = $region12
    $region11: #{lang_sam_text_segmentor.1} parent=5 // pred_region
      %s111 = ssub.s32 %s8, 1
      // Predicated region
      $region13: #{lang_sam_text_segmentor.1} parent=11 // pred_check
        %p112 = pneg %p41
      $region14: #{lang_sam_text_segmentor.1} parent=11 // pred_check_branch
        %114 = sbr.rel (%p112) target = $region16
      $region15: #{lang_sam_text_segmentor.1} parent=11 // pred_region
        _
      $region16: #{lang_sam_text_segmentor.1} parent=11 // pred_fallthru
        _
    $region12: #{lang_sam_text_segmentor.1} parent=5 // pred_fallthru
      _
    %p115 = scmp.lt.s32.totalorder %s8, 2
    // Predicated region
    $region17: #{lang_sam_text_segmentor.1} parent=5 // pred_check
      %p116 = pneg %p115
    $region18: #{lang_sam_text_segmentor.1} parent=5 // pred_check_branch
      %118 = sbr.rel (%p116) target = $region20
    $region19: #{lang_sam_text_segmentor.1} parent=5 // pred_region
      // Predicated region
      $region21: #{lang_sam_text_segmentor.1} parent=19 // pred_check
        %p119 = pneg %p63
      $region22: #{lang_sam_text_segmentor.1} parent=19 // pred_check_branch
        %121 = sbr.rel (%p119) target = $region24
      $region23: #{lang_sam_text_segmentor.1} parent=19 // pred_region
        %s122 = smul.u32 2, %s16
        %p123 = scmp.lt.s32.totalorder %s15, 1
        %s124 = scalar_select %p123, %s15, 1
        %p125 = scmp.lt.s32.totalorder %s122, 1
        %s126 = scalar_select %p125, %s122, 1
        %s127 = smul.addr %s124, 2
        %s128 = sadd.s32 %s126, %s127
        %s129 = smul.addr %s128, 4
        %s130 = scalar_lea.vmem %s1, %s129
        %s131 = smul.u32 2, %s16
      $region24: #{lang_sam_text_segmentor.1} parent=19 // pred_fallthru
        _
    $region20: #{lang_sam_text_segmentor.1} parent=5 // pred_fallthru
      _
    %p132 = scmp.le.s32.totalorder 1, %s8
    %p133 = scmp.lt.s32.totalorder %s8, 3
    %p134 = pnand %p132, %p133
    %p135 = pneg %p134
    // Predicated region
    $region25: #{lang_sam_text_segmentor.1} parent=5 // pred_check
      _
    $region26: #{lang_sam_text_segmentor.1} parent=5 // pred_check_branch
      %137 = sbr.rel (%p134) target = $region28
    $region27: #{lang_sam_text_segmentor.1} parent=5 // pred_region
      %s138 = ssub.s32 %s8, 1
      %p139 = pneg %p41
      %p140 = pneg %p38
      %s141 = smul.u32 2, %s18
      %p142 = scmp.lt.s32.totalorder %s17, 1
      %s143 = scalar_select %p142, %s17, 1
      %p144 = scmp.lt.s32.totalorder %s141, 1
      %s145 = scalar_select %p144, %s141, 1
      %s146 = smul.addr %s143, 2
      %s147 = sadd.s32 %s145, %s146
      %s148 = smul.addr %s147, 4
      %s149 = scalar_lea.vmem %s1, %s148
      %p150 = pneg %p69
      %p151 = pneg %p66
      %p152 = pneg %p97
      %p153 = pneg %p94
      %s154 = smul.u32 2, %s18
      %p155 = scmp.lt.s32.totalorder %s17, 1
      %s156 = scalar_select %p155, %s17, 1
      %p157 = scmp.lt.s32.totalorder %s154, 1
      %s158 = scalar_select %p157, %s154, 1
      %s159 = smul.addr %s156, 2
      %s160 = sadd.s32 %s158, %s159
      %s161 = scalar_lea.vmem %s2, %s160
      %s162 = smul.u32 2, %s18
      %p163 = scmp.lt.s32.totalorder %s17, 1
      %s164 = scalar_select %p163, %s17, 1
      %p165 = scmp.lt.s32.totalorder %s162, 1
      %s166 = scalar_select %p165, %s162, 1
      %s167 = smul.addr %s164, 2
      %s168 = sadd.s32 %s166, %s167
      %s169 = smul.addr %s168, 4
      %s170 = scalar_lea.vmem %s1, %s169
      %s171 = smul.u32 2, %s18
      %s172 = smul.u32 2, %s18
      %p173 = scmp.lt.s32.totalorder %s17, 1
      %s174 = scalar_select %p173, %s17, 1
      %p175 = scmp.lt.s32.totalorder %s172, 1
      %s176 = scalar_select %p175, %s172, 1
      %s177 = smul.addr %s174, 2
      %s178 = sadd.s32 %s176, %s177
      %s179 = scalar_lea.vmem %s2, %s178
      %s180 = smul.u32 2, %s18
      %v181 = vld [vmem:[%s170] ss:$4 sm:$0x3]
      %v182 = vmax.f32 %v181, 0.0
      %v183 = vmin.f32 %v182, 1.0
      %v184 = vld [vmem:[%s0] sm:$0x1]
      %186 = vset.pattern.permute.xlu0 0
      %187 = vperm.xlu0 %186, %v184
      %v188 = vpop.permute.xlu0 %187
      %v189 = vlaneseq
      %v190 = vshrl.u32 %v189, 7
      %v191 = vsub.s32 0, %v190
      %v192 = vrot.slane %v188, %v191
      %v194 = vmul.f32 %v183, %v192
      %s195 = scalar_lea.vmem %s170, 1
      %v196 = vld [vmem:[%s195] ss:$4 sm:$0x3]
      %v197 = vmax.f32 %v196, 0.0
      %v198 = vmin.f32 %v197, 1.0
      %v199 = vld [vmem:[%s0 + $0x1] sm:$0x1]
      %201 = vset.pattern.permute.xlu0 0
      %202 = vperm.xlu0 %201, %v199
      %v203 = vpop.permute.xlu0 %202
      %v204 = vlaneseq
      %v205 = vshrl.u32 %v204, 7
      %v206 = vsub.s32 0, %v205
      %v207 = vrot.slane %v203, %v206
      %v209 = vmul.f32 %v198, %v207
      %v210 = vadd.f32 %v194, %v209
      %s211 = scalar_lea.vmem %s170, 2
      %v212 = vld [vmem:[%s211] ss:$4 sm:$0x3]
      %v213 = vmax.f32 %v212, 0.0
      %v214 = vmin.f32 %v213, 1.0
      %v215 = vld [vmem:[%s0 + $0x2] sm:$0x1]
      %217 = vset.pattern.permute.xlu0 0
      %218 = vperm.xlu0 %217, %v215
      %v219 = vpop.permute.xlu0 %218
      %v220 = vlaneseq
      %v221 = vshrl.u32 %v220, 7
      %v222 = vsub.s32 0, %v221
      %v223 = vrot.slane %v219, %v222
      %v225 = vmul.f32 %v214, %v223
      %v226 = vadd.f32 %v210, %v225
      %v227 = vld [vmem:[%s0 + $0x3] sm:$0x1]
      %229 = vset.pattern.permute.xlu0 0
      %230 = vperm.xlu0 %229, %v227
      %v231 = vpop.permute.xlu0 %230
      %v232 = vlaneseq
      %v233 = vshrl.u32 %v232, 7
      %v234 = vsub.s32 0, %v233
      %v235 = vrot.slane %v231, %v234
      %v237 = vadd.f32 %v226, %v235
      %vm238 = vcmp.gt.f32.partialorder %v237, 0.0
      %v239 = vsel %vm238, 1, 0
      %v240 = vcvt.s32.f32 %v239
      %v241 = vlaneseq
      %vm242 = vcmp.ge.s32.totalorder %v241, 0
      %vm243 = vcmp.lt.s32.totalorder %v241, 256
      %vm244 = vmand %vm242, %vm243
      %245 = vst.msk [vmem:[%s179] sm:$0x3] %vm244, %v240
      %s246 = smul.u32 2, %s18
      %p247 = scmp.lt.s32.totalorder %s17, 1
      %s248 = scalar_select %p247, %s17, 1
      %p249 = scmp.lt.s32.totalorder %s246, 1
      %s250 = scalar_select %p249, %s246, 1
      %s251 = smul.addr %s248, 2
      %s252 = sadd.s32 %s250, %s251
      %s253 = scalar_lea.vmem %s2, %s252
      // Predicated region
      $region29: #{lang_sam_text_segmentor.1} parent=27 // pred_check
        %p254 = pneg %p94
      $region30: #{lang_sam_text_segmentor.1} parent=27 // pred_check_branch
        %256 = sbr.rel (%p254) target = $region32
      $region31: #{lang_sam_text_segmentor.1} parent=27 // pred_region
        %s257 = smul.u32 2, %s18
      $region32: #{lang_sam_text_segmentor.1} parent=27 // pred_fallthru
        _
    $region28: #{lang_sam_text_segmentor.1} parent=5 // pred_fallthru
      _
    %p258 = scmp.le.s32.totalorder 2, %s8
    // Predicated region
    $region33: #{lang_sam_text_segmentor.1} parent=5 // pred_check
      %p259 = pneg %p258
    $region34: #{lang_sam_text_segmentor.1} parent=5 // pred_check_branch
      %261 = sbr.rel (%p259) target = $region36
    $region35: #{lang_sam_text_segmentor.1} parent=5 // pred_region
      %s262 = ssub.s32 %s8, 2
      // Predicated region
      $region37: #{lang_sam_text_segmentor.1} parent=35 // pred_check
        %p263 = pneg %p100
      $region38: #{lang_sam_text_segmentor.1} parent=35 // pred_check_branch
        %265 = sbr.rel (%p263) target = $region40
      $region39: #{lang_sam_text_segmentor.1} parent=35 // pred_region
        %s266 = smul.u32 2, %s20
        %p267 = scmp.lt.s32.totalorder %s19, 1
        %s268 = scalar_select %p267, %s19, 1
        %p269 = scmp.lt.s32.totalorder %s266, 1
        %s270 = scalar_select %p269, %s266, 1
        %s271 = smul.addr %s268, 2
        %s272 = sadd.s32 %s270, %s271
        %s273 = scalar_lea.vmem %s2, %s272
      $region40: #{lang_sam_text_segmentor.1} parent=35 // pred_fallthru
        _
    $region36: #{lang_sam_text_segmentor.1} parent=5 // pred_fallthru
      _
  $region6: #{lang_sam_text_segmentor.1} parent=0 // loop_footer
    %s12 = sadd.s32 1, %s8
  $region7: #{lang_sam_text_segmentor.1} parent=0 // loop_footer_branch
    %7 = sbr.rel target = $region3
  $region8: #{lang_sam_text_segmentor.1} parent=0 // loop_exit
    _

</llo_original>
